<compile_context>
chip_gen: v5e
topology: v5e:2x2
jax: 0.10.0
libtpu: 0.0.40
codegen_flags: <defaults>
</compile_context>

<pallas_src>
from functools import partial

import jax
import jax.numpy as jnp
from jax.experimental import pallas as pl
from jax.experimental.pallas import tpu as pltpu

_EPS = 1e-5
_MAX_TILE_ROWS = 1024        # row-major path (C % 128 == 0)
_MAX_TILE_TOKENS = 2048      # transposed-compute path (small C)
_BLOCK_BYTE_CAP = 2 << 20    # keep double-buffered blocks well inside v5e's 16 MiB scoped VMEM
_MIN_PAR_STEPS = 4           # aim for >= 4 grid steps (2 per TensorCore on v7x) when N allows

_PAR = pltpu.CompilerParams(dimension_semantics=("parallel",))


def _round_up(n, m):
    return (n + m - 1) // m * m


def _pick_tile(n, c, max_tile, align):
    """Rows per block: as large as the byte cap / max allow, but leaving at
    least _MIN_PAR_STEPS grid steps when there is enough data."""
    cap = max(align, (_BLOCK_BYTE_CAP // (c * 4)) // align * align)
    max_tile = min(max_tile, cap)
    if n >= _MIN_PAR_STEPS * max_tile:
        return max_tile
    t = _round_up(max(-(-n // _MIN_PAR_STEPS), 1), align)
    return max(align, min(max_tile, t))


# --------------------------------------------------------------------------- #
# kernels
# --------------------------------------------------------------------------- #
def _ln_small_c_kernel(x_ref, w_ref, b_ref, o_ref, *, eps):
    """x_ref: (tile, C) row-major block with small C (C % 128 != 0).

    Relayout on-chip to (C, tile) so the reduction runs over sublanes and all
    elementwise work is lane-dense (tile is a multiple of 128)."""
    xt = x_ref[...].astype(jnp.float32).T                      # (C, tile) — XLU transpose
    mu = jnp.mean(xt, axis=0, keepdims=True)                   # (1, tile)
    xc = xt - mu
    var = jnp.mean(xc * xc, axis=0, keepdims=True)             # biased variance
    yt = xc * jax.lax.rsqrt(var + eps)                         # EUP rsqrt, no divide
    yt = yt * w_ref[...].astype(jnp.float32) + b_ref[...].astype(jnp.float32)  # (C,1) bcast
    o_ref[...] = yt.T.astype(o_ref.dtype)                      # back to (tile, C)


def _ln_row_kernel(x_ref, w_ref, b_ref, o_ref, *, eps):
    """x_ref: (tile, C) with C a multiple of 128 — already lane-dense."""
    x = x_ref[...].astype(jnp.float32)
    mu = jnp.mean(x, axis=-1, keepdims=True)
    xc = x - mu
    var = jnp.mean(xc * xc, axis=-1, keepdims=True)
    y = xc * jax.lax.rsqrt(var + eps)
    y = y * w_ref[...].astype(jnp.float32) + b_ref[...].astype(jnp.float32)    # (1,C) bcast
    o_ref[...] = y.astype(o_ref.dtype)


# --------------------------------------------------------------------------- #
# wrapper
# --------------------------------------------------------------------------- #
def withbias_layernorm(x, weight, bias, *, eps=_EPS):
    """PyTorch WithBias_LayerNorm.forward: LayerNorm over the last dim, with bias.

    x: (..., C), weight/bias: (C,).  Returns the same shape/dtype as x.
    """
    orig_shape = x.shape
    C = int(orig_shape[-1])
    N = 1
    for d in orig_shape[:-1]:
        N *= int(d)
    x2 = x.reshape(N, C)                                       # free (contiguous) reshape

    if C % 128 == 0:
        # Row-major path: the normalized axis is already lane-dense.
        tile = _pick_tile(N, C, _MAX_TILE_ROWS, 8)
        out = pl.pallas_call(
            partial(_ln_row_kernel, eps=eps),
            out_shape=jax.ShapeDtypeStruct((N, C), x.dtype),
            grid=(pl.cdiv(N, tile),),                          # ragged grid, no pad/slice
            in_specs=[pl.BlockSpec((tile, C), lambda i: (i, 0)),
                      pl.BlockSpec((1, C), lambda i: (0, 0)),
                      pl.BlockSpec((1, C), lambda i: (0, 0))],
            out_specs=pl.BlockSpec((tile, C), lambda i: (i, 0)),
            compiler_params=_PAR,
        )(x2, weight.reshape(1, C), bias.reshape(1, C))
    else:
        # Small-C path: DMA row-major blocks, relayout on-chip to (C, tile).
        tile = _pick_tile(N, C, _MAX_TILE_TOKENS, 128)
        out = pl.pallas_call(
            partial(_ln_small_c_kernel, eps=eps),
            out_shape=jax.ShapeDtypeStruct((N, C), x.dtype),
            grid=(pl.cdiv(N, tile),),                          # ragged grid, no pad/slice
            in_specs=[pl.BlockSpec((tile, C), lambda i: (i, 0)),
                      pl.BlockSpec((C, 1), lambda i: (0, 0)),
                      pl.BlockSpec((C, 1), lambda i: (0, 0))],
            out_specs=pl.BlockSpec((tile, C), lambda i: (i, 0)),
            compiler_params=_PAR,
        )(x2, weight.reshape(C, 1), bias.reshape(C, 1))

    return out.reshape(orig_shape)


# --------------------------------------------------------------------------- #
# reference + demo
# --------------------------------------------------------------------------- #
def _layernorm_ref(x, w, b, eps=_EPS):
    mu = jnp.mean(x, axis=-1, keepdims=True)
    var = jnp.mean(jnp.square(x - mu), axis=-1, keepdims=True)
    return (x - mu) / jnp.sqrt(var + eps) * w + b


if __name__ == "__main__":
    key = jax.random.PRNGKey(0)
    keys = jax.random.split(key, 9)

    fwd = jax.jit(withbias_layernorm)

    # Case 1: channel LayerNorm in AttentionTransHDR — (B, H*W, C) with C = dim = 16.
    B, HW, C = 2, 16 * 16, 16
    x = jax.random.normal(keys[0], (B, HW, C), jnp.float32)
    w = 1.0 + 0.1 * jax.random.normal(keys[1], (C,), jnp.float32)
    b = 0.1 * jax.random.normal(keys[2], (C,), jnp.float32)
    y = jax.block_until_ready(fwd(x, w, b))
    assert y.shape == x.shape and y.dtype == x.dtype
    assert bool(jnp.all(jnp.isfinite(y)))
    assert bool(jnp.allclose(y, _layernorm_ref(x, w, b), rtol=2e-5, atol=2e-5))

    # Case 2: patch-embedding LayerNorm — (B, n_tokens, emb) with emb = 4*4*16 = 256.
    B2, T2, C2 = 2, 16, 256
    x2 = jax.random.normal(keys[3], (B2, T2, C2), jnp.float32)
    w2 = 1.0 + 0.1 * jax.random.normal(keys[4], (C2,), jnp.float32)
    b2 = 0.1 * jax.random.normal(keys[5], (C2,), jnp.float32)
    y2 = jax.block_until_ready(fwd(x2, w2, b2))
    assert y2.shape == x2.shape
    assert bool(jnp.allclose(y2, _layernorm_ref(x2, w2, b2), rtol=2e-5, atol=2e-5))

    # Case 3: ragged token count (exercises the masked partial last block — no pad/slice).
    B3, HW3, C3 = 3, 100, 16
    x3 = jax.random.normal(keys[6], (B3, HW3, C3), jnp.float32)
    w3 = 1.0 + 0.1 * jax.random.normal(keys[7], (C3,), jnp.float32)
    b3 = 0.1 * jax.random.normal(keys[8], (C3,), jnp.float32)
    y3 = jax.block_until_ready(fwd(x3, w3, b3))
    assert y3.shape == x3.shape
    assert bool(jnp.all(jnp.isfinite(y3)))
    assert bool(jnp.allclose(y3, _layernorm_ref(x3, w3, b3), rtol=2e-5, atol=2e-5))

    print("KERNEL_OK")
</pallas_src>

<mosaic_0001>
module attributes {stable_mosaic.version = 11 : i64} {
  func.func @_ln_small_c_kernel(%arg0: i32, %arg1: memref<128x16xf32, #tpu.memory_space<vmem>>, %arg2: memref<16x1xf32, #tpu.memory_space<vmem>>, %arg3: memref<16x1xf32, #tpu.memory_space<vmem>>, %arg4: memref<128x16xf32, #tpu.memory_space<vmem>>) attributes {dimension_semantics = [#tpu.dimension_semantics<parallel>], iteration_bounds = array<i64: 4>, scalar_prefetch = 0 : i64, scratch_operands = 0 : i64, tpu.core_type = #tpu.core_type<tc>, window_params = [{transform_indices = @transform_0, window_bounds = array<i64: 128, 16>}, {pipeline_mode = #tpu.pipeline_mode<synchronous>, transform_indices = @transform_1, window_bounds = array<i64: 16, 1>}, {pipeline_mode = #tpu.pipeline_mode<synchronous>, transform_indices = @transform_2, window_bounds = array<i64: 16, 1>}, {transform_indices = @transform_3, window_bounds = array<i64: 128, 16>}]} {
    %c0 = arith.constant 0 : index
    %c0_0 = arith.constant 0 : index
    %0 = vector.load %arg1[%c0, %c0_0] : memref<128x16xf32, #tpu.memory_space<vmem>>, vector<128x16xf32>
    %1 = tpu.transpose %0, [1, 0] : vector<128x16xf32> -> vector<16x128xf32>
    %cst = arith.constant dense<0.000000e+00> : vector<128xf32>
    %2 = vector.multi_reduction <add>, %1, %cst [0] : vector<16x128xf32> to vector<128xf32>
    %3 = vector.shape_cast %2 : vector<128xf32> to vector<1x128xf32>
    %cst_1 = arith.constant 1.600000e+01 : f32
    %4 = vector.broadcast %cst_1 : f32 to vector<1x128xf32>
    %5 = arith.divf %3, %4 : vector<1x128xf32>
    %6 = vector.broadcast %5 : vector<1x128xf32> to vector<16x128xf32>
    %7 = arith.subf %1, %6 : vector<16x128xf32>
    %8 = arith.mulf %7, %7 : vector<16x128xf32>
    %cst_2 = arith.constant dense<0.000000e+00> : vector<128xf32>
    %9 = vector.multi_reduction <add>, %8, %cst_2 [0] : vector<16x128xf32> to vector<128xf32>
    %10 = vector.shape_cast %9 : vector<128xf32> to vector<1x128xf32>
    %cst_3 = arith.constant 1.600000e+01 : f32
    %11 = vector.broadcast %cst_3 : f32 to vector<1x128xf32>
    %12 = arith.divf %10, %11 : vector<1x128xf32>
    %cst_4 = arith.constant 9.99999974E-6 : f32
    %13 = vector.broadcast %cst_4 : f32 to vector<1x128xf32>
    %14 = arith.addf %12, %13 : vector<1x128xf32>
    %15 = math.rsqrt %14 : vector<1x128xf32>
    %16 = vector.broadcast %15 : vector<1x128xf32> to vector<16x128xf32>
    %17 = arith.mulf %7, %16 : vector<16x128xf32>
    %c0_5 = arith.constant 0 : index
    %c0_6 = arith.constant 0 : index
    %18 = vector.load %arg2[%c0_5, %c0_6] : memref<16x1xf32, #tpu.memory_space<vmem>>, vector<16x1xf32>
    %19 = vector.broadcast %18 : vector<16x1xf32> to vector<16x128xf32>
    %20 = arith.mulf %17, %19 : vector<16x128xf32>
    %c0_7 = arith.constant 0 : index
    %c0_8 = arith.constant 0 : index
    %21 = vector.load %arg3[%c0_7, %c0_8] : memref<16x1xf32, #tpu.memory_space<vmem>>, vector<16x1xf32>
    %22 = vector.broadcast %21 : vector<16x1xf32> to vector<16x128xf32>
    %23 = arith.addf %20, %22 : vector<16x128xf32>
    %24 = tpu.transpose %23, [1, 0] : vector<16x128xf32> -> vector<128x16xf32>
    %c0_9 = arith.constant 0 : index
    %c0_10 = arith.constant 0 : index
    %25 = vector.load %arg4[%c0_9, %c0_10] : memref<128x16xf32, #tpu.memory_space<vmem>>, vector<128x16xf32>
    tpu.vector_store %arg4[%c0_9, %c0_10], %24 {strides = array<i32>} : memref<128x16xf32, #tpu.memory_space<vmem>>, vector<128x16xf32>,
    return
  }
  func.func @transform_0(%arg0: i32) -> (i32, i32) {
    %c0_i32 = arith.constant 0 : i32
    %c0_i32_0 = arith.constant 0 : i32
    return %arg0, %c0_i32 : i32, i32
  }
  func.func @transform_1(%arg0: i32) -> (i32, i32) {
    %c0_i32 = arith.constant 0 : i32
    %c0_i32_0 = arith.constant 0 : i32
    %c0_i32_1 = arith.constant 0 : i32
    return %c0_i32, %c0_i32_0 : i32, i32
  }
  func.func @transform_2(%arg0: i32) -> (i32, i32) {
    %c0_i32 = arith.constant 0 : i32
    %c0_i32_0 = arith.constant 0 : i32
    %c0_i32_1 = arith.constant 0 : i32
    return %c0_i32, %c0_i32_0 : i32, i32
  }
  func.func @transform_3(%arg0: i32) -> (i32, i32) {
    %c0_i32 = arith.constant 0 : i32
    %c0_i32_0 = arith.constant 0 : i32
    return %arg0, %c0_i32 : i32, i32
  }
}

</mosaic_0001>

<llo_original>
// kernel: withbias_layernorm.1
$region0: #{withbias_layernorm.1}
  #allocation0 [shape = 'u32[]', space=smem, size = 0x4, offset = 0x4, fixed_abs, tag = 'smem constant byte address 0x4 - core index']
  #allocation1 [shape = 'u32[72,128]{1,0:T(1,128)}', space=vmem, size = 0x9000, scoped, tag = 'internal scratch']
  %s0 = inlined_call_operand.vmem [shape: f32[512,16], index: 0, kind: input, shape index: {}]
  %s1 = inlined_call_operand.vmem [shape: f32[16,1], index: 1, kind: input, shape index: {}]
  %s2 = inlined_call_operand.vmem [shape: f32[16,1], index: 2, kind: input, shape index: {}]
  %s3 = inlined_call_operand.vmem [shape: f32[512,16], index: 3, kind: output, shape index: {}]
  %s4 = sld [smem:[#allocation0]]
  $region45: #{withbias_layernorm.1} parent=0
    _
  %s6 = ssub.s32 1, %s4
  %s7 = scalar_select 0, %s6, %s4
  loop: start=0, step=1, limit=6
  $region2: #{withbias_layernorm.1} parent=0 // loop_pre_header
    _
  $region3: #{withbias_layernorm.1} parent=0 // loop_header
    %s9 = sphi 0, %s13
    %p10 = scmp.ge.s32.totalorder %s9, 6
    %s19 = sphi 0, %s21
    %s22 = sphi 0, %s19
    %s23 = sphi 0, %s22
    %s39 = sphi 0, %s23
    %s43 = sphi 0, %s43
    %s45 = sphi 0, %s43
    %s46 = sphi 0, %s45
    %s60 = sphi 0, %s46
    %s64 = sphi 0, %s64
    %s66 = sphi 0, %s64
    %s67 = sphi 0, %s66
    %s81 = sphi 0, %s67
    %s87 = sphi 0, %s89
    %s90 = sphi 0, %s87
    %s91 = sphi 0, %s90
    %s107 = sphi 0, %s91
  $region4: #{withbias_layernorm.1} parent=0 // loop_header_branch
    %12 = sbr.rel (%p10) target = $region8
  $region5: #{withbias_layernorm.1} parent=0 // loop_body
    %s14 = ssub.s32 %s9, 1
    %s15 = ssub.s32 %s9, 2
    %s16 = sadd.s32 %s9, 1
    %s17 = ssub.s32 %s9, %s16
    %p18 = scmp.eq.s32.totalorder %s17, 0
    %s20 = sadd.s32 %s19, 1
    %s21 = scalar_select %p18, %s19, %s20
    %p24 = pneg %p18
    %p25 = scmp.eq.s32.totalorder %s9, 3
    %p26 = por %p24, %p25
    %p27 = scmp.ne.s32.totalorder %s19, %s22
    %p28 = scmp.eq.s32.totalorder %s9, 0
    %p29 = por %p27, %p28
    %p30 = scmp.ne.s32.totalorder %s19, %s22
    %p31 = scmp.eq.s32.totalorder %s14, 3
    %p32 = por %p30, %p31
    %p33 = scmp.ne.s32.totalorder %s22, %s23
    %p34 = scmp.eq.s32.totalorder %s14, 0
    %p35 = por %p33, %p34
    %p36 = scmp.ne.s32.totalorder %s22, %s23
    %p37 = scmp.eq.s32.totalorder %s15, 3
    %p38 = por %p36, %p37
    %p40 = scmp.ne.s32.totalorder %s23, %s39
    %p41 = scmp.eq.s32.totalorder %s15, 0
    %p42 = por %p40, %p41
    %s44 = sadd.s32 %s43, 1
    %p47 = scmp.eq.s32.totalorder %s9, 3
    %p48 = scmp.ne.s32.totalorder %s43, %s45
    %p49 = scmp.eq.s32.totalorder %s9, 0
    %p50 = por %p48, %p49
    %p51 = scmp.ne.s32.totalorder %s43, %s45
    %p52 = scmp.eq.s32.totalorder %s14, 3
    %p53 = por %p51, %p52
    %p54 = scmp.ne.s32.totalorder %s45, %s46
    %p55 = scmp.eq.s32.totalorder %s14, 0
    %p56 = por %p54, %p55
    %p57 = scmp.ne.s32.totalorder %s45, %s46
    %p58 = scmp.eq.s32.totalorder %s15, 3
    %p59 = por %p57, %p58
    %p61 = scmp.ne.s32.totalorder %s46, %s60
    %p62 = scmp.eq.s32.totalorder %s15, 0
    %p63 = por %p61, %p62
    %s65 = sadd.s32 %s64, 1
    %p68 = scmp.eq.s32.totalorder %s9, 3
    %p69 = scmp.ne.s32.totalorder %s64, %s66
    %p70 = scmp.eq.s32.totalorder %s9, 0
    %p71 = por %p69, %p70
    %p72 = scmp.ne.s32.totalorder %s64, %s66
    %p73 = scmp.eq.s32.totalorder %s14, 3
    %p74 = por %p72, %p73
    %p75 = scmp.ne.s32.totalorder %s66, %s67
    %p76 = scmp.eq.s32.totalorder %s14, 0
    %p77 = por %p75, %p76
    %p78 = scmp.ne.s32.totalorder %s66, %s67
    %p79 = scmp.eq.s32.totalorder %s15, 3
    %p80 = por %p78, %p79
    %p82 = scmp.ne.s32.totalorder %s67, %s81
    %p83 = scmp.eq.s32.totalorder %s15, 0
    %p84 = por %p82, %p83
    %s85 = ssub.s32 %s9, %s16
    %p86 = scmp.eq.s32.totalorder %s85, 0
    %s88 = sadd.s32 %s87, 1
    %s89 = scalar_select %p86, %s87, %s88
    %p92 = pneg %p86
    %p93 = scmp.eq.s32.totalorder %s9, 3
    %p94 = por %p92, %p93
    %p95 = scmp.ne.s32.totalorder %s87, %s90
    %p96 = scmp.eq.s32.totalorder %s9, 0
    %p97 = por %p95, %p96
    %p98 = scmp.ne.s32.totalorder %s87, %s90
    %p99 = scmp.eq.s32.totalorder %s14, 3
    %p100 = por %p98, %p99
    %p101 = scmp.ne.s32.totalorder %s90, %s91
    %p102 = scmp.eq.s32.totalorder %s14, 0
    %p103 = por %p101, %p102
    %p104 = scmp.ne.s32.totalorder %s90, %s91
    %p105 = scmp.eq.s32.totalorder %s15, 3
    %p106 = por %p104, %p105
    %p108 = scmp.ne.s32.totalorder %s91, %s107
    %p109 = scmp.eq.s32.totalorder %s15, 0
    %p110 = por %p108, %p109
    %p111 = scmp.le.s32.totalorder 1, %s9
    %p112 = scmp.lt.s32.totalorder %s9, 5
    %p113 = pnand %p111, %p112
    %p114 = pneg %p113
    // Predicated region
    $region9: #{withbias_layernorm.1} parent=5 // pred_check
      _
    $region10: #{withbias_layernorm.1} parent=5 // pred_check_branch
      %116 = sbr.rel (%p113) target = $region12
    $region11: #{withbias_layernorm.1} parent=5 // pred_region
      %s117 = ssub.s32 %s9, 1
      // Predicated region
      $region13: #{withbias_layernorm.1} parent=11 // pred_check
        %p118 = pneg %p56
      $region14: #{withbias_layernorm.1} parent=11 // pred_check_branch
        %120 = sbr.rel (%p118) target = $region16
      $region15: #{withbias_layernorm.1} parent=11 // pred_region
        _
      $region16: #{withbias_layernorm.1} parent=11 // pred_fallthru
        _
      // Predicated region
      $region17: #{withbias_layernorm.1} parent=11 // pred_check
        %p121 = pneg %p77
      $region18: #{withbias_layernorm.1} parent=11 // pred_check_branch
        %123 = sbr.rel (%p121) target = $region20
      $region19: #{withbias_layernorm.1} parent=11 // pred_region
        _
      $region20: #{withbias_layernorm.1} parent=11 // pred_fallthru
        _
    $region12: #{withbias_layernorm.1} parent=5 // pred_fallthru
      _
    %p124 = scmp.lt.s32.totalorder %s9, 4
    // Predicated region
    $region21: #{withbias_layernorm.1} parent=5 // pred_check
      %p125 = pneg %p124
    $region22: #{withbias_layernorm.1} parent=5 // pred_check_branch
      %127 = sbr.rel (%p125) target = $region24
    $region23: #{withbias_layernorm.1} parent=5 // pred_region
      // Predicated region
      $region25: #{withbias_layernorm.1} parent=23 // pred_check
        %p128 = pneg %p29
      $region26: #{withbias_layernorm.1} parent=23 // pred_check_branch
        %130 = sbr.rel (%p128) target = $region28
      $region27: #{withbias_layernorm.1} parent=23 // pred_region
        %s131 = smul.u32 16, %s9
        %p132 = scmp.lt.s32.totalorder %s131, 63
        %s133 = scalar_select %p132, %s131, 63
        %s134 = smul.addr %s133, 8
        %s135 = scalar_lea.vmem %s0, %s134
        %s136 = smul.u32 16, %s9
      $region28: #{withbias_layernorm.1} parent=23 // pred_fallthru
        _
    $region24: #{withbias_layernorm.1} parent=5 // pred_fallthru
      _
    %p137 = scmp.le.s32.totalorder 1, %s9
    %p138 = scmp.lt.s32.totalorder %s9, 5
    %p139 = pnand %p137, %p138
    %p140 = pneg %p139
    // Predicated region
    $region29: #{withbias_layernorm.1} parent=5 // pred_check
      _
    $region30: #{withbias_layernorm.1} parent=5 // pred_check_branch
      %142 = sbr.rel (%p139) target = $region32
    $region31: #{withbias_layernorm.1} parent=5 // pred_region
      %s143 = ssub.s32 %s9, 1
      %s144 = smul.u32 16, %s14
      %p145 = scmp.lt.s32.totalorder %s144, 63
      %s146 = scalar_select %p145, %s144, 63
      %s147 = smul.addr %s146, 8
      %s148 = scalar_lea.vmem %s0, %s147
      %p149 = pneg %p35
      %p150 = pneg %p32
      %p151 = pneg %p56
      %p152 = pneg %p53
      %p153 = pneg %p77
      %p154 = pneg %p74
      %p155 = pneg %p103
      %p156 = pneg %p100
      %s157 = smul.u32 16, %s14
      %p158 = scmp.lt.s32.totalorder %s157, 63
      %s159 = scalar_select %p158, %s157, 63
      %s160 = smul.addr %s159, 8
      %s161 = scalar_lea.vmem %s3, %s160
      %s162 = smul.u32 16, %s14
      %p163 = scmp.lt.s32.totalorder %s162, 63
      %s164 = scalar_select %p163, %s162, 63
      %s165 = smul.addr %s164, 8
      %s166 = scalar_lea.vmem %s0, %s165
      %s167 = smul.u32 16, %s14
      %s168 = smul.u32 16, %s14
      %p169 = scmp.lt.s32.totalorder %s168, 63
      %s170 = scalar_select %p169, %s168, 63
      %s171 = smul.addr %s170, 8
      %s172 = scalar_lea.vmem %s3, %s171
      %s173 = smul.u32 16, %s14
      %v174 = vld [vmem:[%s166] sm:$0xff]
      %v175 = vld [vmem:[%s166 + $0x8] sm:$0xff]
      %v176 = vld [vmem:[%s166 + $0x10] sm:$0xff]
      %v177 = vld [vmem:[%s166 + $0x18] sm:$0xff]
      %v178 = vld [vmem:[%s166 + $0x20] sm:$0xff]
      %v179 = vld [vmem:[%s166 + $0x28] sm:$0xff]
      %v180 = vld [vmem:[%s166 + $0x30] sm:$0xff]
      %v181 = vld [vmem:[%s166 + $0x38] sm:$0xff]
      %v182 = vld [vmem:[%s166 + $0x40] sm:$0xff]
      %v183 = vld [vmem:[%s166 + $0x48] sm:$0xff]
      %v184 = vld [vmem:[%s166 + $0x50] sm:$0xff]
      %v185 = vld [vmem:[%s166 + $0x58] sm:$0xff]
      %v186 = vld [vmem:[%s166 + $0x60] sm:$0xff]
      %v187 = vld [vmem:[%s166 + $0x68] sm:$0xff]
      %v188 = vld [vmem:[%s166 + $0x70] sm:$0xff]
      %v189 = vld [vmem:[%s166 + $0x78] sm:$0xff]
      %190 = vxpose.xlu0.b32.start [1/16] %v174, 128
      %191 = vxpose.xlu0.b32.cont [2/16] %v175, 128
      %192 = vxpose.xlu0.b32.cont [3/16] %v176, 128
      %193 = vxpose.xlu0.b32.cont [4/16] %v177, 128
      %194 = vxpose.xlu0.b32.cont [5/16] %v178, 128
      %195 = vxpose.xlu0.b32.cont [6/16] %v179, 128
      %196 = vxpose.xlu0.b32.cont [7/16] %v180, 128
      %197 = vxpose.xlu0.b32.cont [8/16] %v181, 128
      %198 = vxpose.xlu0.b32.cont [9/16] %v182, 128
      %199 = vxpose.xlu0.b32.cont [10/16] %v183, 128
      %200 = vxpose.xlu0.b32.cont [11/16] %v184, 128
      %201 = vxpose.xlu0.b32.cont [12/16] %v185, 128
      %202 = vxpose.xlu0.b32.cont [13/16] %v186, 128
      %203 = vxpose.xlu0.b32.cont [14/16] %v187, 128
      %204 = vxpose.xlu0.b32.cont [15/16] %v188, 128
      %205 = vxpose.xlu0.b32.end [16/16] %v189, 128
      %v206 = vpop.trf.xlu0
      %v207 = vpop.trf.xlu0
      %v208 = vpop.trf.xlu0
      %v209 = vpop.trf.xlu0
      %v210 = vpop.trf.xlu0
      %v211 = vpop.trf.xlu0
      %v212 = vpop.trf.xlu0
      %v213 = vpop.trf.xlu0
      %v214 = vpop.trf.xlu0
      %v215 = vpop.trf.xlu0
      %v216 = vpop.trf.xlu0
      %v217 = vpop.trf.xlu0
      %v218 = vpop.trf.xlu0
      %v219 = vpop.trf.xlu0
      %v220 = vpop.trf.xlu0
      %v221 = vpop.trf.xlu0
      %v222 = vadd.f32 %v206, %v207
      %v223 = vrot.slane %v222, 4
      %v224 = vadd.f32 %v222, %v223
      %v225 = vrot.slane %v224, 2
      %v226 = vadd.f32 %v224, %v225
      %v227 = vrot.slane %v226, 1
      %v228 = vadd.f32 %v226, %v227
      %v229 = vrcp.pop 16.0
      %v230 = vmul.f32 16.0, %v229
      %v231 = vsub.f32 1.0, %v230
      %v232 = vmul.f32 %v229, %v231
      %v233 = vadd.f32 %v229, %v232
      %vm234 = vweird.f32 %v229
      %v235 = vsel %vm234, %v229, %v233
      %v236 = vmul.f32 %v228, %v235
      %v237 = vsub.f32 %v206, %v236
      %v238 = vsub.f32 %v207, %v236
      %v239 = vmul.f32 %v237, %v237
      %v240 = vmul.f32 %v238, %v238
      %v241 = vadd.f32 %v239, %v240
      %v242 = vrot.slane %v241, 4
      %v243 = vadd.f32 %v241, %v242
      %v244 = vrot.slane %v243, 2
      %v245 = vadd.f32 %v243, %v244
      %v246 = vrot.slane %v245, 1
      %v247 = vadd.f32 %v245, %v246
      %v248 = vmul.f32 %v247, %v235
      %v249 = vadd.f32 %v248, 1e-05
      %v250 = vrsqrt.pop %v249
      %v251 = vmul.f32 %v250, %v249
      %v252 = vmul.f32 %v251, %v250
      %v253 = vmul.f32 0.5, %v252
      %v254 = vsub.f32 1.5, %v253
      %v255 = vmul.f32 %v250, %v254
      %vm256 = vweird.f32 %v249
      %vm257 = vweird.f32 %v250
      %vm258 = vmor %vm256, %vm257
      %v259 = vsel %vm258, %v250, %v255
      %v260 = vmul.f32 %v237, %v259
      %v261 = vmul.f32 %v238, %v259
      %v262 = vld [vmem:[%s1] sm:$0xff]
      %v263 = vld [vmem:[%s1 + $0x8] sm:$0xff]
      %265 = vset.pattern.permute.xlu0 0
      %266 = vperm.xlu0 %265, %v262
      %v267 = vpop.permute.xlu0 %266
      %270 = vset.pattern.permute.xlu0 0
      %271 = vperm.xlu0 %270, %v263
      %v272 = vpop.permute.xlu0 %271
      %v274 = vmul.f32 %v260, %v267
      %v275 = vmul.f32 %v261, %v272
      %v276 = vld [vmem:[%s2] sm:$0xff]
      %v277 = vld [vmem:[%s2 + $0x8] sm:$0xff]
      %279 = vset.pattern.permute.xlu0 0
      %280 = vperm.xlu0 %279, %v276
      %v281 = vpop.permute.xlu0 %280
      %284 = vset.pattern.permute.xlu0 0
      %285 = vperm.xlu0 %284, %v277
      %v286 = vpop.permute.xlu0 %285
      %v288 = vadd.f32 %v274, %v281
      %v289 = vadd.f32 %v275, %v286
      %290 = vxpose.xlu0.b32.start [1/16] %v288, 128
      %291 = vxpose.xlu0.b32.cont [2/16] %v289, 128
      %292 = vxpose.xlu0.b32.cont [3/16] 0.0, 128
      %293 = vxpose.xlu0.b32.cont [4/16] 0.0, 128
      %294 = vxpose.xlu0.b32.cont [5/16] 0.0, 128
      %295 = vxpose.xlu0.b32.cont [6/16] 0.0, 128
      %296 = vxpose.xlu0.b32.cont [7/16] 0.0, 128
      %297 = vxpose.xlu0.b32.cont [8/16] 0.0, 128
      %298 = vxpose.xlu0.b32.cont [9/16] 0.0, 128
      %299 = vxpose.xlu0.b32.cont [10/16] 0.0, 128
      %300 = vxpose.xlu0.b32.cont [11/16] 0.0, 128
      %301 = vxpose.xlu0.b32.cont [12/16] 0.0, 128
      %302 = vxpose.xlu0.b32.cont [13/16] 0.0, 128
      %303 = vxpose.xlu0.b32.cont [14/16] 0.0, 128
      %304 = vxpose.xlu0.b32.cont [15/16] 0.0, 128
      %305 = vxpose.xlu0.b32.end [16/16] 0.0, 128
      %v306 = vpop.trf.xlu0
      %v307 = vpop.trf.xlu0
      %v308 = vpop.trf.xlu0
      %v309 = vpop.trf.xlu0
      %v310 = vpop.trf.xlu0
      %v311 = vpop.trf.xlu0
      %v312 = vpop.trf.xlu0
      %v313 = vpop.trf.xlu0
      %v314 = vpop.trf.xlu0
      %v315 = vpop.trf.xlu0
      %v316 = vpop.trf.xlu0
      %v317 = vpop.trf.xlu0
      %v318 = vpop.trf.xlu0
      %v319 = vpop.trf.xlu0
      %v320 = vpop.trf.xlu0
      %v321 = vpop.trf.xlu0
      %vm322 = vcmask 130048
      %323 = vst.msk [vmem:[%s172] sm:$0xff] %vm322, %v306
      %324 = vst.msk [vmem:[%s172 + $0x8] sm:$0xff] %vm322, %v307
      %325 = vst.msk [vmem:[%s172 + $0x10] sm:$0xff] %vm322, %v308
      %326 = vst.msk [vmem:[%s172 + $0x18] sm:$0xff] %vm322, %v309
      %327 = vst.msk [vmem:[%s172 + $0x20] sm:$0xff] %vm322, %v310
      %328 = vst.msk [vmem:[%s172 + $0x28] sm:$0xff] %vm322, %v311
      %329 = vst.msk [vmem:[%s172 + $0x30] sm:$0xff] %vm322, %v312
      %330 = vst.msk [vmem:[%s172 + $0x38] sm:$0xff] %vm322, %v313
      %331 = vst.msk [vmem:[%s172 + $0x40] sm:$0xff] %vm322, %v314
      %332 = vst.msk [vmem:[%s172 + $0x48] sm:$0xff] %vm322, %v315
      %333 = vst.msk [vmem:[%s172 + $0x50] sm:$0xff] %vm322, %v316
      %334 = vst.msk [vmem:[%s172 + $0x58] sm:$0xff] %vm322, %v317
      %335 = vst.msk [vmem:[%s172 + $0x60] sm:$0xff] %vm322, %v318
      %336 = vst.msk [vmem:[%s172 + $0x68] sm:$0xff] %vm322, %v319
      %337 = vst.msk [vmem:[%s172 + $0x70] sm:$0xff] %vm322, %v320
      %338 = vst.msk [vmem:[%s172 + $0x78] sm:$0xff] %vm322, %v321
      %s339 = smul.u32 16, %s14
      %p340 = scmp.lt.s32.totalorder %s339, 63
      %s341 = scalar_select %p340, %s339, 63
      %s342 = smul.addr %s341, 8
      %s343 = scalar_lea.vmem %s3, %s342
      // Predicated region
      $region33: #{withbias_layernorm.1} parent=31 // pred_check
        %p344 = pneg %p100
      $region34: #{withbias_layernorm.1} parent=31 // pred_check_branch
        %346 = sbr.rel (%p344) target = $region36
      $region35: #{withbias_layernorm.1} parent=31 // pred_region
        %s347 = smul.u32 16, %s14
      $region36: #{withbias_layernorm.1} parent=31 // pred_fallthru
        _
    $region32: #{withbias_layernorm.1} parent=5 // pred_fallthru
      _
    %p348 = scmp.le.s32.totalorder 2, %s9
    // Predicated region
    $region37: #{withbias_layernorm.1} parent=5 // pred_check
      %p349 = pneg %p348
    $region38: #{withbias_layernorm.1} parent=5 // pred_check_branch
      %351 = sbr.rel (%p349) target = $region40
    $region39: #{withbias_layernorm.1} parent=5 // pred_region
      %s352 = ssub.s32 %s9, 2
      // Predicated region
      $region41: #{withbias_layernorm.1} parent=39 // pred_check
        %p353 = pneg %p106
      $region42: #{withbias_layernorm.1} parent=39 // pred_check_branch
        %355 = sbr.rel (%p353) target = $region44
      $region43: #{withbias_layernorm.1} parent=39 // pred_region
        %s356 = smul.u32 16, %s15
        %p357 = scmp.lt.s32.totalorder %s356, 63
        %s358 = scalar_select %p357, %s356, 63
        %s359 = smul.addr %s358, 8
        %s360 = scalar_lea.vmem %s3, %s359
      $region44: #{withbias_layernorm.1} parent=39 // pred_fallthru
        _
    $region40: #{withbias_layernorm.1} parent=5 // pred_fallthru
      _
  $region6: #{withbias_layernorm.1} parent=0 // loop_footer
    %s13 = sadd.s32 1, %s9
  $region7: #{withbias_layernorm.1} parent=0 // loop_footer_branch
    %8 = sbr.rel target = $region3
  $region8: #{withbias_layernorm.1} parent=0 // loop_exit
    _

</llo_original>
